<compile_context>
chip_gen: v7x
topology: tpu7x:2x2x1
jax: 0.10.0
libtpu: 0.0.40
codegen_flags: <defaults>
</compile_context>

<pallas_src>
import jax
import jax.numpy as jnp
from jax.experimental import pallas as pl
from jax.experimental.pallas import tpu as pltpu

SUBLANE = 8  # f32 sublane width (second-to-last dim granularity)


def _round_up(x, m):
    return (x + m - 1) // m * m


def actor_kernel(obs_ref, w1_ref, b1_ref, w2_ref, b2_ref, w3_ref, b3_ref, out_ref):
    # linear_1 + ReLU (MXU matmul, f32 accumulation)
    x = obs_ref[...]
    h1 = jnp.maximum(
        jnp.dot(x, w1_ref[...], preferred_element_type=jnp.float32) + b1_ref[...], 0.0)

    # linear_2 + ReLU  (.astype is a no-op in the f32 path; feeds bf16 MXU otherwise)
    h1 = h1.astype(w2_ref.dtype)
    h2 = jnp.maximum(
        jnp.dot(h1, w2_ref[...], preferred_element_type=jnp.float32) + b2_ref[...], 0.0)

    # linear_3 + softmax over the real dim_action lanes (no padded-lane sentinel).
    h2 = h2.astype(w3_ref.dtype)
    logits = jnp.dot(h2, w3_ref[...], preferred_element_type=jnp.float32) + b3_ref[...]
    m = jnp.max(logits, axis=1, keepdims=True)
    e = jnp.exp(logits - m)
    denom = jnp.sum(e, axis=1, keepdims=True)
    # Exact reciprocal-multiply keeps the 1e-5 reference tolerance; the kernel
    # is memory-bound, so this VALU cost is invisible.  (If it ever showed on
    # the VALU: approx=True + one Newton step.)
    out_ref[...] = (e * pl.reciprocal(denom, approx=False)).astype(out_ref.dtype)


def init_actor_params(key, dim_obs, dim_action, hidden_size):
    """Deterministic init mimicking nn.Linear's U(-1/sqrt(fan_in), 1/sqrt(fan_in)).

    Weights stored as [in, out] so the kernel computes x @ W on the MXU.
    All shapes stay at natural size — no lane padding anywhere.
    """
    def linear_init(k, fan_in, fan_out):
        kw, kb = jax.random.split(k)
        bound = 1.0 / jnp.sqrt(float(fan_in))
        w = jax.random.uniform(kw, (fan_in, fan_out), jnp.float32, -bound, bound)
        b = jax.random.uniform(kb, (1, fan_out), jnp.float32, -bound, bound)
        return w, b

    k1, k2, k3 = jax.random.split(key, 3)
    w1, b1 = linear_init(k1, dim_obs, hidden_size)
    w2, b2 = linear_init(k2, hidden_size, hidden_size)
    w3, b3 = linear_init(k3, hidden_size, dim_action)
    return {"w1": w1, "b1": b1, "w2": w2, "b2": b2, "w3": w3, "b3": b3}


def actor_forward(obs, params, *, row_tile=1024, use_bf16=False,
                  vmem_limit_bytes=32 * 1024 * 1024):
    """obs: [B, dim_obs] float32; params: output of init_actor_params.

    use_bf16=True (v6e/v7x): obs + weights in bf16 on the MXU, f32 accumulation,
    bias/softmax/output in f32.  Loosens accuracy vs. the f32 reference to
    roughly 1e-2/1e-3 — keep it off when the 1e-5 check matters.
    """
    w1, b1 = params["w1"], params["b1"]
    w2, b2 = params["w2"], params["b2"]
    w3, b3 = params["w3"], params["b3"]

    B, dim_obs = obs.shape
    assert dim_obs == w1.shape[0]
    hidden = w1.shape[1]
    dim_action = w3.shape[1]

    compute_dtype = jnp.bfloat16 if use_bf16 else jnp.float32
    obs_c = obs.astype(compute_dtype)           # no-op copy avoided when already f32
    w1c = w1.astype(compute_dtype)
    w2c = w2.astype(compute_dtype)
    w3c = w3.astype(compute_dtype)

    # Row tiling: if the whole batch fits in one tile, use a single full-array
    # block (no batch padding, no wrapper jnp.pad pass at all).  Otherwise use
    # a sublane-aligned tile and pad the batch to a tile multiple.
    if B <= row_tile:
        tb, b_pad = B, B
    else:
        tb = _round_up(row_tile, SUBLANE)
        b_pad = _round_up(B, tb)
        if b_pad > B:
            obs_c = jnp.pad(obs_c, ((0, b_pad - B), (0, 0)))

    grid = (b_pad // tb,)

    def resident(shape):
        # Weights/biases: same block every grid step -> loaded once, stay in VMEM.
        return pl.BlockSpec(shape, lambda i: (0, 0))

    out = pl.pallas_call(
        actor_kernel,
        out_shape=jax.ShapeDtypeStruct((b_pad, dim_action), jnp.float32),
        grid=grid,
        in_specs=[
            # obs streamed over the batch; last dim = natural dim_obs (full-array dim).
            pl.BlockSpec((tb, dim_obs), lambda i: (i, 0)),
            resident((dim_obs, hidden)), resident((1, hidden)),      # w1, b1
            resident((hidden, hidden)),  resident((1, hidden)),      # w2, b2
            resident((hidden, dim_action)), resident((1, dim_action)),  # w3, b3
        ],
        # Output at natural action width: minimal writeback, no external lane slice.
        out_specs=pl.BlockSpec((tb, dim_action), lambda i: (i, 0)),
        compiler_params=pltpu.CompilerParams(
            dimension_semantics=("parallel",),      # megacore batch sharding on v7x
            vmem_limit_bytes=vmem_limit_bytes,      # explicit: v5e default is only 16 MiB
        ),
    )(obs_c, w1c, b1, w2c, b2, w3c, b3)

    # Only a (cheap, narrow) batch slice when padding was actually needed; the
    # padded rows hold valid softmaxes of zero observations and must not leak.
    return out if b_pad == B else out[:B]


def actor_forward_ref(obs, p):
    """Pure-JAX reference for correctness check."""
    h1 = jnp.maximum(obs @ p["w1"] + p["b1"], 0.0)
    h2 = jnp.maximum(h1 @ p["w2"] + p["b2"], 0.0)
    return jax.nn.softmax(h2 @ p["w3"] + p["b3"], axis=1)


if __name__ == "__main__":
    B, DIM_OBS, DIM_ACTION, HIDDEN = 2, 16, 8, 32

    key = jax.random.PRNGKey(0)
    k_obs, k_params, k_big = jax.random.split(key, 3)

    obs = jax.random.normal(k_obs, (B, DIM_OBS), dtype=jnp.float32)
    params = init_actor_params(k_params, DIM_OBS, DIM_ACTION, HIDDEN)

    # Small-shape check (single grid step, zero padding anywhere, f32 path).
    out = actor_forward(obs, params)
    out = jax.block_until_ready(out)
    ref = actor_forward_ref(obs, params)
    assert out.shape == (B, DIM_ACTION)
    assert jnp.allclose(jnp.sum(out, axis=1), 1.0, atol=1e-5)
    assert jnp.allclose(out, ref, atol=1e-5, rtol=1e-5)

    # Exercise the tiled streaming path (grid > 1, B not a tile multiple) to
    # validate BlockSpec pipelining, batch padding and the row slice-back.
    B_BIG = 2500
    obs_big = jax.random.normal(k_big, (B_BIG, DIM_OBS), dtype=jnp.float32)
    out_big = jax.block_until_ready(actor_forward(obs_big, params, row_tile=1024))
    ref_big = actor_forward_ref(obs_big, params)
    assert out_big.shape == (B_BIG, DIM_ACTION)
    assert jnp.allclose(jnp.sum(out_big, axis=1), 1.0, atol=1e-4)
    assert jnp.allclose(out_big, ref_big, atol=1e-4, rtol=1e-4)

    print("KERNEL_OK")
</pallas_src>

<mosaic_0001>
module attributes {stable_mosaic.version = 11 : i64} {
  func.func @actor_kernel(%arg0: i32, %arg1: memref<2x16xf32, #tpu.memory_space<vmem>>, %arg2: memref<16x32xf32, #tpu.memory_space<vmem>>, %arg3: memref<1x32xf32, #tpu.memory_space<vmem>>, %arg4: memref<32x32xf32, #tpu.memory_space<vmem>>, %arg5: memref<1x32xf32, #tpu.memory_space<vmem>>, %arg6: memref<32x8xf32, #tpu.memory_space<vmem>>, %arg7: memref<1x8xf32, #tpu.memory_space<vmem>>, %arg8: memref<2x8xf32, #tpu.memory_space<vmem>>) attributes {dimension_semantics = [#tpu.dimension_semantics<parallel>], iteration_bounds = array<i64: 1>, scalar_prefetch = 0 : i64, scratch_operands = 0 : i64, tpu.core_type = #tpu.core_type<tc>, window_params = [{transform_indices = @transform_0, window_bounds = array<i64: 2, 16>}, {pipeline_mode = #tpu.pipeline_mode<synchronous>, transform_indices = @transform_1, window_bounds = array<i64: 16, 32>}, {pipeline_mode = #tpu.pipeline_mode<synchronous>, transform_indices = @transform_2, window_bounds = array<i64: 1, 32>}, {pipeline_mode = #tpu.pipeline_mode<synchronous>, transform_indices = @transform_3, window_bounds = array<i64: 32, 32>}, {pipeline_mode = #tpu.pipeline_mode<synchronous>, transform_indices = @transform_4, window_bounds = array<i64: 1, 32>}, {pipeline_mode = #tpu.pipeline_mode<synchronous>, transform_indices = @transform_5, window_bounds = array<i64: 32, 8>}, {pipeline_mode = #tpu.pipeline_mode<synchronous>, transform_indices = @transform_6, window_bounds = array<i64: 1, 8>}, {transform_indices = @transform_7, window_bounds = array<i64: 2, 8>}]} {
    %c0 = arith.constant 0 : index
    %c0_0 = arith.constant 0 : index
    %0 = vector.load %arg1[%c0, %c0_0] : memref<2x16xf32, #tpu.memory_space<vmem>>, vector<2x16xf32>
    %c0_1 = arith.constant 0 : index
    %c0_2 = arith.constant 0 : index
    %1 = vector.load %arg2[%c0_1, %c0_2] : memref<16x32xf32, #tpu.memory_space<vmem>>, vector<16x32xf32>
    %cst = arith.constant dense<0.000000e+00> : vector<2x32xf32>
    %2 = tpu.matmul %0, %1, %cst {dimension_numbers = #tpu.dot_dimension_numbers<[1], [0], [0], [1], [0, 0, 1, 1], [], []>} : vector<2x16xf32>, vector<16x32xf32>, vector<2x32xf32> -> vector<2x32xf32>
    %c0_3 = arith.constant 0 : index
    %c0_4 = arith.constant 0 : index
    %3 = vector.load %arg3[%c0_3, %c0_4] : memref<1x32xf32, #tpu.memory_space<vmem>>, vector<1x32xf32>
    %4 = vector.broadcast %3 : vector<1x32xf32> to vector<2x32xf32>
    %5 = arith.addf %2, %4 : vector<2x32xf32>
    %cst_5 = arith.constant 0.000000e+00 : f32
    %6 = vector.broadcast %cst_5 : f32 to vector<2x32xf32>
    %7 = arith.maximumf %5, %6 : vector<2x32xf32>
    %c0_6 = arith.constant 0 : index
    %c0_7 = arith.constant 0 : index
    %8 = vector.load %arg4[%c0_6, %c0_7] : memref<32x32xf32, #tpu.memory_space<vmem>>, vector<32x32xf32>
    %cst_8 = arith.constant dense<0.000000e+00> : vector<2x32xf32>
    %9 = tpu.matmul %7, %8, %cst_8 {dimension_numbers = #tpu.dot_dimension_numbers<[1], [0], [0], [1], [0, 0, 1, 1], [], []>} : vector<2x32xf32>, vector<32x32xf32>, vector<2x32xf32> -> vector<2x32xf32>
    %c0_9 = arith.constant 0 : index
    %c0_10 = arith.constant 0 : index
    %10 = vector.load %arg5[%c0_9, %c0_10] : memref<1x32xf32, #tpu.memory_space<vmem>>, vector<1x32xf32>
    %11 = vector.broadcast %10 : vector<1x32xf32> to vector<2x32xf32>
    %12 = arith.addf %9, %11 : vector<2x32xf32>
    %cst_11 = arith.constant 0.000000e+00 : f32
    %13 = vector.broadcast %cst_11 : f32 to vector<2x32xf32>
    %14 = arith.maximumf %12, %13 : vector<2x32xf32>
    %c0_12 = arith.constant 0 : index
    %c0_13 = arith.constant 0 : index
    %15 = vector.load %arg6[%c0_12, %c0_13] : memref<32x8xf32, #tpu.memory_space<vmem>>, vector<32x8xf32>
    %cst_14 = arith.constant dense<0.000000e+00> : vector<2x8xf32>
    %16 = tpu.matmul %14, %15, %cst_14 {dimension_numbers = #tpu.dot_dimension_numbers<[1], [0], [0], [1], [0, 0, 1, 1], [], []>} : vector<2x32xf32>, vector<32x8xf32>, vector<2x8xf32> -> vector<2x8xf32>
    %c0_15 = arith.constant 0 : index
    %c0_16 = arith.constant 0 : index
    %17 = vector.load %arg7[%c0_15, %c0_16] : memref<1x8xf32, #tpu.memory_space<vmem>>, vector<1x8xf32>
    %18 = vector.broadcast %17 : vector<1x8xf32> to vector<2x8xf32>
    %19 = arith.addf %16, %18 : vector<2x8xf32>
    %cst_17 = arith.constant dense<0xFF800000> : vector<2xf32>
    %20 = vector.multi_reduction <maximumf>, %19, %cst_17 [1] : vector<2x8xf32> to vector<2xf32>
    %21 = vector.shape_cast %20 : vector<2xf32> to vector<2x1xf32>
    %22 = vector.broadcast %21 : vector<2x1xf32> to vector<2x8xf32>
    %23 = arith.subf %19, %22 : vector<2x8xf32>
    %24 = math.exp %23 : vector<2x8xf32>
    %cst_18 = arith.constant dense<0.000000e+00> : vector<2xf32>
    %25 = vector.multi_reduction <add>, %24, %cst_18 [1] : vector<2x8xf32> to vector<2xf32>
    %26 = vector.shape_cast %25 : vector<2xf32> to vector<2x1xf32>
    %27 = tpu.reciprocal %26 : vector<2x1xf32> -> vector<2x1xf32>
    %28 = vector.broadcast %27 : vector<2x1xf32> to vector<2x8xf32>
    %29 = arith.mulf %24, %28 : vector<2x8xf32>
    %c0_19 = arith.constant 0 : index
    %c0_20 = arith.constant 0 : index
    %30 = vector.load %arg8[%c0_19, %c0_20] : memref<2x8xf32, #tpu.memory_space<vmem>>, vector<2x8xf32>
    tpu.vector_store %arg8[%c0_19, %c0_20], %29 {strides = array<i32>} : memref<2x8xf32, #tpu.memory_space<vmem>>, vector<2x8xf32>,
    return
  }
  func.func @transform_0(%arg0: i32) -> (i32, i32) {
    %c0_i32 = arith.constant 0 : i32
    %c0_i32_0 = arith.constant 0 : i32
    return %arg0, %c0_i32 : i32, i32
  }
  func.func @transform_1(%arg0: i32) -> (i32, i32) {
    %c0_i32 = arith.constant 0 : i32
    %c0_i32_0 = arith.constant 0 : i32
    %c0_i32_1 = arith.constant 0 : i32
    return %c0_i32, %c0_i32_0 : i32, i32
  }
  func.func @transform_2(%arg0: i32) -> (i32, i32) {
    %c0_i32 = arith.constant 0 : i32
    %c0_i32_0 = arith.constant 0 : i32
    %c0_i32_1 = arith.constant 0 : i32
    return %c0_i32, %c0_i32_0 : i32, i32
  }
  func.func @transform_3(%arg0: i32) -> (i32, i32) {
    %c0_i32 = arith.constant 0 : i32
    %c0_i32_0 = arith.constant 0 : i32
    %c0_i32_1 = arith.constant 0 : i32
    return %c0_i32, %c0_i32_0 : i32, i32
  }
  func.func @transform_4(%arg0: i32) -> (i32, i32) {
    %c0_i32 = arith.constant 0 : i32
    %c0_i32_0 = arith.constant 0 : i32
    %c0_i32_1 = arith.constant 0 : i32
    return %c0_i32, %c0_i32_0 : i32, i32
  }
  func.func @transform_5(%arg0: i32) -> (i32, i32) {
    %c0_i32 = arith.constant 0 : i32
    %c0_i32_0 = arith.constant 0 : i32
    %c0_i32_1 = arith.constant 0 : i32
    return %c0_i32, %c0_i32_0 : i32, i32
  }
  func.func @transform_6(%arg0: i32) -> (i32, i32) {
    %c0_i32 = arith.constant 0 : i32
    %c0_i32_0 = arith.constant 0 : i32
    %c0_i32_1 = arith.constant 0 : i32
    return %c0_i32, %c0_i32_0 : i32, i32
  }
  func.func @transform_7(%arg0: i32) -> (i32, i32) {
    %c0_i32 = arith.constant 0 : i32
    %c0_i32_0 = arith.constant 0 : i32
    return %arg0, %c0_i32 : i32, i32
  }
}

</mosaic_0001>

<llo_original>
// kernel: tpu_custom_call.1
$region0: #{tpu_custom_call.1}
  #allocation0 [shape = 'u32[]', space=smem, size = 0x4, offset = 0x4, fixed_abs, tag = 'smem constant byte address 0x4 - core index']
  #allocation1 [shape = 'u32[144,128]{1,0:T(1,128)}', space=vmem, size = 0x12000, scoped, tag = 'internal scratch']
  %s0 = inlined_call_operand.vmem [shape: f32[2,16], index: 0, kind: input, shape index: {}]
  %s1 = inlined_call_operand.vmem [shape: f32[16,32], index: 1, kind: input, shape index: {}]
  %s2 = inlined_call_operand.hbm [shape: f32[1,32], index: 2, kind: input, shape index: {}]
  %s3 = inlined_call_operand.vmem [shape: f32[32,32], index: 3, kind: input, shape index: {}]
  %s4 = inlined_call_operand.hbm [shape: f32[1,32], index: 4, kind: input, shape index: {}]
  %s5 = inlined_call_operand.vmem [shape: f32[32,8], index: 5, kind: input, shape index: {}]
  %s6 = inlined_call_operand.vmem [shape: f32[1,8], index: 6, kind: input, shape index: {}]
  %s7 = inlined_call_operand.hbm [shape: f32[2,8], index: 7, kind: output, shape index: {}]
  %s8 = sld [smem:[#allocation0]]
  $region46: #{tpu_custom_call.1} parent=0
    _
  %s10 = ssub.s32 1, %s8
  %s11 = scalar_select 0, %s10, %s8
  $region1: #{tpu_custom_call.1} parent=0
    #allocation2 [shape = 'u8[512]{0}', space=vmem, size = 0x400, scoped, tag = 'input window, operand 2, single buffered']
    #allocation3 [shape = 's32[1]{0}', space=sflag, size = 0x4, scoped, tag = 'scoped memory for tpu_custom_call.1']
    #allocation4 [shape = 's32[1]{0}', space=sflag, size = 0x4, scoped, tag = 'scoped memory for tpu_custom_call.1']
    #allocation5 [shape = 'u8[512]{0}', space=vmem, size = 0x400, scoped, tag = 'input window, operand 4, single buffered']
    #allocation6 [shape = 's32[1]{0}', space=sflag, size = 0x4, scoped, tag = 'scoped memory for tpu_custom_call.1']
    #allocation7 [shape = 'u8[1024]{0}', space=vmem, size = 0x400, scoped, tag = 'output window, operand 0, single buffered']
    %12 = vsyncpa [#allocation3], 0
    %13 = vsyncpa [#allocation6], 0
    %14 = vsyncpa [#allocation4], 0
    // Predicated region
    $region2: #{tpu_custom_call.1} parent=1 // pred_check
      _
    $region3: #{tpu_custom_call.1} parent=1 // pred_check_branch
      %16 = sbr.rel (0) target = $region5
    $region4: #{tpu_custom_call.1} parent=1 // pred_region
      _
    $region5: #{tpu_custom_call.1} parent=1 // pred_fallthru
      _
    // Predicated region
    $region6: #{tpu_custom_call.1} parent=1 // pred_check
      _
    $region7: #{tpu_custom_call.1} parent=1 // pred_check_branch
      %18 = sbr.rel (0) target = $region9
    $region8: #{tpu_custom_call.1} parent=1 // pred_region
      _
    $region9: #{tpu_custom_call.1} parent=1 // pred_fallthru
      _
    // Predicated region
    $region10: #{tpu_custom_call.1} parent=1 // pred_check
      _
    $region11: #{tpu_custom_call.1} parent=1 // pred_check_branch
      %20 = sbr.rel (0) target = $region13
    $region12: #{tpu_custom_call.1} parent=1 // pred_region
      %s22 = ssub.s32 16, 16
      %23 = vsyncadd [#allocation3], %s22
      %s25 = sshll.u32 [#allocation2], 4
      %s26 = int_to_ptr.vmem [resolvable:$true] %s25
      %28 = dma.hbm_to_vmem [thread:$0]  %s2, 16, %s26, [#allocation3]
    $region13: #{tpu_custom_call.1} parent=1 // pred_fallthru
      _
    // Predicated region
    $region14: #{tpu_custom_call.1} parent=1 // pred_check
      _
    $region15: #{tpu_custom_call.1} parent=1 // pred_check_branch
      %30 = sbr.rel (0) target = $region17
    $region16: #{tpu_custom_call.1} parent=1 // pred_region
      _
    $region17: #{tpu_custom_call.1} parent=1 // pred_fallthru
      _
    // Predicated region
    $region18: #{tpu_custom_call.1} parent=1 // pred_check
      _
    $region19: #{tpu_custom_call.1} parent=1 // pred_check_branch
      %32 = sbr.rel (0) target = $region21
    $region20: #{tpu_custom_call.1} parent=1 // pred_region
      %s34 = ssub.s32 16, 16
      %35 = vsyncadd [#allocation6], %s34
      %s37 = sshll.u32 [#allocation5], 4
      %s38 = int_to_ptr.vmem [resolvable:$true] %s37
      %40 = dma.hbm_to_vmem [thread:$0]  %s4, 16, %s38, [#allocation6]
    $region21: #{tpu_custom_call.1} parent=1 // pred_fallthru
      _
    // Predicated region
    $region22: #{tpu_custom_call.1} parent=1 // pred_check
      _
    $region23: #{tpu_custom_call.1} parent=1 // pred_check_branch
      %42 = sbr.rel (0) target = $region25
    $region24: #{tpu_custom_call.1} parent=1 // pred_region
      _
    $region25: #{tpu_custom_call.1} parent=1 // pred_fallthru
      _
    // Predicated region
    $region26: #{tpu_custom_call.1} parent=1 // pred_check
      _
    $region27: #{tpu_custom_call.1} parent=1 // pred_check_branch
      %44 = sbr.rel (0) target = $region29
    $region28: #{tpu_custom_call.1} parent=1 // pred_region
      _
    $region29: #{tpu_custom_call.1} parent=1 // pred_fallthru
      _
    // Predicated region
    $region30: #{tpu_custom_call.1} parent=1 // pred_check
      _
    $region31: #{tpu_custom_call.1} parent=1 // pred_check_branch
      %46 = sbr.rel (0) target = $region33
    $region32: #{tpu_custom_call.1} parent=1 // pred_region
      %47 = dma.done [#allocation3], 16
    $region33: #{tpu_custom_call.1} parent=1 // pred_fallthru
      _
    // Predicated region
    $region34: #{tpu_custom_call.1} parent=1 // pred_check
      _
    $region35: #{tpu_custom_call.1} parent=1 // pred_check_branch
      %49 = sbr.rel (0) target = $region37
    $region36: #{tpu_custom_call.1} parent=1 // pred_region
      %50 = dma.done [#allocation6], 16
    $region37: #{tpu_custom_call.1} parent=1 // pred_fallthru
      _
    %v51 = vld [vmem:[%s0] sm:$0x3]
    %v52 = vld [vmem:[%s1] sm:$0xff]
    %v53 = vld [vmem:[%s1 + $0x8] sm:$0xff]
    %v54 = vld [vmem:[#allocation2] sm:$0x1]
    %v56 = vlaneseq
    %v57 = vshrl.u32 %v56, 7
    %v58 = vsub.s32 0, %v57
    %v59 = vrot.slane %v54, %v58
    %vm61 = vcmask 130048
    %v63 = vsel %vm61, %v51, 0
    %65 = vmatprep.subr.mxu0 0.0
    %66 = vmatpush1.msra.mxu0 %v52
    %67 = vmatprep.subr.mxu0 0.0
    %68 = vmatpush1.msra.mxu0 %v53
    %69 = vmatprep.subr.mxu0 0.0
    %70 = vmatpush1.msra.mxu0 0.0
    %71 = vmatprep.subr.mxu0 0.0
    %72 = vmatpush1.msra.mxu0 0.0
    %73 = vmatprep.subr.mxu0 0.0
    %74 = vmatpush1.msra.mxu0 0.0
    %75 = vmatprep.subr.mxu0 0.0
    %76 = vmatpush1.msra.mxu0 0.0
    %77 = vmatprep.subr.mxu0 0.0
    %78 = vmatpush1.msra.mxu0 0.0
    %79 = vmatprep.subr.mxu0 0.0
    %80 = vmatpush1.msra.mxu0 0.0
    %81 = vmatprep.subr.mxu0 0.0
    %82 = vmatpush1.msra.mxu0 0.0
    %83 = vmatprep.subr.mxu0 0.0
    %84 = vmatpush1.msra.mxu0 0.0
    %85 = vmatprep.subr.mxu0 0.0
    %86 = vmatpush1.msra.mxu0 0.0
    %87 = vmatprep.subr.mxu0 0.0
    %88 = vmatpush1.msra.mxu0 0.0
    %89 = vmatprep.subr.mxu0 0.0
    %90 = vmatpush1.msra.mxu0 0.0
    %91 = vmatprep.subr.mxu0 0.0
    %92 = vmatpush1.msra.mxu0 0.0
    %93 = vmatprep.subr.mxu0 0.0
    %94 = vmatpush1.msra.mxu0 0.0
    %95 = vmatprep.subr.mxu0 0.0
    %96 = vmatpush1.msra.mxu0 0.0
    %97 = vmatprep.subr.mxu0 0.0
    %98 = vmatpush1.msra.mxu0 0.0
    %99 = vmatprep.subr.mxu0 0.0
    %100 = vmatpush1.msra.mxu0 0.0
    %101 = vmatprep.subr.mxu0 0.0
    %102 = vmatpush1.msra.mxu0 0.0
    %103 = vmatprep.subr.mxu0 0.0
    %104 = vmatpush1.msra.mxu0 0.0
    %105 = vmatprep.subr.mxu0 0.0
    %106 = vmatpush1.msra.mxu0 0.0
    %107 = vmatprep.subr.mxu0 0.0
    %108 = vmatpush1.msra.mxu0 0.0
    %109 = vmatprep.subr.mxu0 0.0
    %110 = vmatpush1.msra.mxu0 0.0
    %111 = vmatprep.subr.mxu0 0.0
    %112 = vmatpush1.msra.mxu0 0.0
    %113 = vmatprep.subr.mxu0 0.0
    %114 = vmatpush1.msra.mxu0 0.0
    %115 = vmatprep.subr.mxu0 0.0
    %116 = vmatpush1.msra.mxu0 0.0
    %117 = vmatprep.subr.mxu0 0.0
    %118 = vmatpush1.msra.mxu0 0.0
    %119 = vmatprep.subr.mxu0 0.0
    %120 = vmatpush1.msra.mxu0 0.0
    %121 = vmatprep.subr.mxu0 0.0
    %122 = vmatpush1.msra.mxu0 0.0
    %123 = vmatprep.subr.mxu0 0.0
    %124 = vmatpush1.msra.mxu0 0.0
    %125 = vmatprep.subr.mxu0 0.0
    %126 = vmatpush1.msra.mxu0 0.0
    %127 = vmatprep.subr.mxu0 0.0
    %128 = vmatpush1.msra.mxu0 0.0
    %129 = vmatprep.mubr.f32.mxu0 0.0
    %130 = vmatmul.mubr.f32.gmra.mrb[0].mxu0 %v63
    %v131 = vpop.f32.mrb[0].mxu0
    %v132 = vadd.f32 %v59, %v131
    %v133 = vpop.f32.mrb[0].mxu0
    %134 = vdwg.mxu0
    %v135 = vmax.f32 %v132, 0.0
    %v136 = vld [vmem:[%s3] sm:$0xff]
    %v137 = vld [vmem:[%s3 + $0x8] sm:$0xff]
    %v138 = vld [vmem:[%s3 + $0x10] sm:$0xff]
    %v139 = vld [vmem:[%s3 + $0x18] sm:$0xff]
    %v140 = vld [vmem:[#allocation5] sm:$0x1]
    %v142 = vlaneseq
    %v143 = vshrl.u32 %v142, 7
    %v144 = vsub.s32 0, %v143
    %v145 = vrot.slane %v140, %v144
    %vm147 = vcmask 261120
    %v149 = vsel %vm147, %v135, 0
    %151 = vmatprep.subr.mxu0 0.0
    %152 = vmatpush1.msra.mxu0 %v136
    %153 = vmatprep.subr.mxu0 0.0
    %154 = vmatpush1.msra.mxu0 %v137
    %155 = vmatprep.subr.mxu0 0.0
    %156 = vmatpush1.msra.mxu0 %v138
    %157 = vmatprep.subr.mxu0 0.0
    %158 = vmatpush1.msra.mxu0 %v139
    %159 = vmatprep.subr.mxu0 0.0
    %160 = vmatpush1.msra.mxu0 0.0
    %161 = vmatprep.subr.mxu0 0.0
    %162 = vmatpush1.msra.mxu0 0.0
    %163 = vmatprep.subr.mxu0 0.0
    %164 = vmatpush1.msra.mxu0 0.0
    %165 = vmatprep.subr.mxu0 0.0
    %166 = vmatpush1.msra.mxu0 0.0
    %167 = vmatprep.subr.mxu0 0.0
    %168 = vmatpush1.msra.mxu0 0.0
    %169 = vmatprep.subr.mxu0 0.0
    %170 = vmatpush1.msra.mxu0 0.0
    %171 = vmatprep.subr.mxu0 0.0
    %172 = vmatpush1.msra.mxu0 0.0
    %173 = vmatprep.subr.mxu0 0.0
    %174 = vmatpush1.msra.mxu0 0.0
    %175 = vmatprep.subr.mxu0 0.0
    %176 = vmatpush1.msra.mxu0 0.0
    %177 = vmatprep.subr.mxu0 0.0
    %178 = vmatpush1.msra.mxu0 0.0
    %179 = vmatprep.subr.mxu0 0.0
    %180 = vmatpush1.msra.mxu0 0.0
    %181 = vmatprep.subr.mxu0 0.0
    %182 = vmatpush1.msra.mxu0 0.0
    %183 = vmatprep.subr.mxu0 0.0
    %184 = vmatpush1.msra.mxu0 0.0
    %185 = vmatprep.subr.mxu0 0.0
    %186 = vmatpush1.msra.mxu0 0.0
    %187 = vmatprep.subr.mxu0 0.0
    %188 = vmatpush1.msra.mxu0 0.0
    %189 = vmatprep.subr.mxu0 0.0
    %190 = vmatpush1.msra.mxu0 0.0
    %191 = vmatprep.subr.mxu0 0.0
    %192 = vmatpush1.msra.mxu0 0.0
    %193 = vmatprep.subr.mxu0 0.0
    %194 = vmatpush1.msra.mxu0 0.0
    %195 = vmatprep.subr.mxu0 0.0
    %196 = vmatpush1.msra.mxu0 0.0
    %197 = vmatprep.subr.mxu0 0.0
    %198 = vmatpush1.msra.mxu0 0.0
    %199 = vmatprep.subr.mxu0 0.0
    %200 = vmatpush1.msra.mxu0 0.0
    %201 = vmatprep.subr.mxu0 0.0
    %202 = vmatpush1.msra.mxu0 0.0
    %203 = vmatprep.subr.mxu0 0.0
    %204 = vmatpush1.msra.mxu0 0.0
    %205 = vmatprep.subr.mxu0 0.0
    %206 = vmatpush1.msra.mxu0 0.0
    %207 = vmatprep.subr.mxu0 0.0
    %208 = vmatpush1.msra.mxu0 0.0
    %209 = vmatprep.subr.mxu0 0.0
    %210 = vmatpush1.msra.mxu0 0.0
    %211 = vmatprep.subr.mxu0 0.0
    %212 = vmatpush1.msra.mxu0 0.0
    %213 = vmatprep.subr.mxu0 0.0
    %214 = vmatpush1.msra.mxu0 0.0
    %215 = vmatprep.mubr.f32.mxu0 0.0
    %216 = vmatmul.mubr.f32.gmra.mrb[0].mxu0 %v149
    %v217 = vpop.f32.mrb[0].mxu0
    %v218 = vadd.f32 %v145, %v217
    %v219 = vpop.f32.mrb[0].mxu0
    %220 = vdwg.mxu0
    %v221 = vmax.f32 %v218, 0.0
    %v222 = vld [vmem:[%s5] sm:$0xff]
    %v223 = vld [vmem:[%s5 + $0x8] sm:$0xff]
    %v224 = vld [vmem:[%s5 + $0x10] sm:$0xff]
    %v225 = vld [vmem:[%s5 + $0x18] sm:$0xff]
    %v226 = vld [vmem:[%s6] sm:$0x1]
    %v228 = vlaneseq
    %v229 = vshrl.u32 %v228, 7
    %v230 = vsub.s32 0, %v229
    %v231 = vrot.slane %v226, %v230
    %v234 = vsel %vm147, %v221, 0
    %236 = vmatprep.subr.mxu0 0.0
    %237 = vmatpush1.msra.mxu0 %v222
    %238 = vmatprep.subr.mxu0 0.0
    %239 = vmatpush1.msra.mxu0 %v223
    %240 = vmatprep.subr.mxu0 0.0
    %241 = vmatpush1.msra.mxu0 %v224
    %242 = vmatprep.subr.mxu0 0.0
    %243 = vmatpush1.msra.mxu0 %v225
    %244 = vmatprep.subr.mxu0 0.0
    %245 = vmatpush1.msra.mxu0 0.0
    %246 = vmatprep.subr.mxu0 0.0
    %247 = vmatpush1.msra.mxu0 0.0
    %248 = vmatprep.subr.mxu0 0.0
    %249 = vmatpush1.msra.mxu0 0.0
    %250 = vmatprep.subr.mxu0 0.0
    %251 = vmatpush1.msra.mxu0 0.0
    %252 = vmatprep.subr.mxu0 0.0
    %253 = vmatpush1.msra.mxu0 0.0
    %254 = vmatprep.subr.mxu0 0.0
    %255 = vmatpush1.msra.mxu0 0.0
    %256 = vmatprep.subr.mxu0 0.0
    %257 = vmatpush1.msra.mxu0 0.0
    %258 = vmatprep.subr.mxu0 0.0
    %259 = vmatpush1.msra.mxu0 0.0
    %260 = vmatprep.subr.mxu0 0.0
    %261 = vmatpush1.msra.mxu0 0.0
    %262 = vmatprep.subr.mxu0 0.0
    %263 = vmatpush1.msra.mxu0 0.0
    %264 = vmatprep.subr.mxu0 0.0
    %265 = vmatpush1.msra.mxu0 0.0
    %266 = vmatprep.subr.mxu0 0.0
    %267 = vmatpush1.msra.mxu0 0.0
    %268 = vmatprep.subr.mxu0 0.0
    %269 = vmatpush1.msra.mxu0 0.0
    %270 = vmatprep.subr.mxu0 0.0
    %271 = vmatpush1.msra.mxu0 0.0
    %272 = vmatprep.subr.mxu0 0.0
    %273 = vmatpush1.msra.mxu0 0.0
    %274 = vmatprep.subr.mxu0 0.0
    %275 = vmatpush1.msra.mxu0 0.0
    %276 = vmatprep.subr.mxu0 0.0
    %277 = vmatpush1.msra.mxu0 0.0
    %278 = vmatprep.subr.mxu0 0.0
    %279 = vmatpush1.msra.mxu0 0.0
    %280 = vmatprep.subr.mxu0 0.0
    %281 = vmatpush1.msra.mxu0 0.0
    %282 = vmatprep.subr.mxu0 0.0
    %283 = vmatpush1.msra.mxu0 0.0
    %284 = vmatprep.subr.mxu0 0.0
    %285 = vmatpush1.msra.mxu0 0.0
    %286 = vmatprep.subr.mxu0 0.0
    %287 = vmatpush1.msra.mxu0 0.0
    %288 = vmatprep.subr.mxu0 0.0
    %289 = vmatpush1.msra.mxu0 0.0
    %290 = vmatprep.subr.mxu0 0.0
    %291 = vmatpush1.msra.mxu0 0.0
    %292 = vmatprep.subr.mxu0 0.0
    %293 = vmatpush1.msra.mxu0 0.0
    %294 = vmatprep.subr.mxu0 0.0
    %295 = vmatpush1.msra.mxu0 0.0
    %296 = vmatprep.subr.mxu0 0.0
    %297 = vmatpush1.msra.mxu0 0.0
    %298 = vmatprep.subr.mxu0 0.0
    %299 = vmatpush1.msra.mxu0 0.0
    %300 = vmatprep.mubr.f32.mxu0 0.0
    %301 = vmatmul.mubr.f32.gmra.mrb[0].mxu0 %v234
    %v302 = vpop.f32.mrb[0].mxu0
    %v303 = vadd.f32 %v231, %v302
    %v304 = vpop.f32.mrb[0].mxu0
    %305 = vdwg.mxu0
    %vm306 = vcmask 58368
    %v307 = vsel %vm306, %v303, -inf
    %308 = vmax.xlane.f32.xlu0 %v307
    %v309 = vpop.xlane.xlu0 %308
    %v310 = vsub.f32 %v303, %v309
    %v311 = vmul.f32 %v310, 1.442695
    %v312 = vpow.pop %v311
    %v313 = vsel %vm306, %v312, 0.0
    %314 = vadd.xlane.f32.xlu0 %v313
    %v315 = vpop.xlane.xlu0 %314
    %v316 = vrcp.pop %v315
    %v317 = vmul.f32 %v312, %v316
    %318 = vst.msk [vmem:[#allocation7] sm:$0x3] %vm306, %v317
    // Predicated region
    $region38: #{tpu_custom_call.1} parent=1 // pred_check
      _
    $region39: #{tpu_custom_call.1} parent=1 // pred_check_branch
      %320 = sbr.rel (0) target = $region41
    $region40: #{tpu_custom_call.1} parent=1 // pred_region
      %s322 = ssub.s32 32, 32
      %323 = vsyncadd [#allocation4], %s322
      %s325 = sshll.u32 [#allocation7], 4
      %s326 = int_to_ptr.vmem [resolvable:$true] %s325
      %328 = dma.vmem_to_hbm [thread:$0]  %s326, 32, %s7, [#allocation4]
    $region41: #{tpu_custom_call.1} parent=1 // pred_fallthru
      _
    // Predicated region
    $region42: #{tpu_custom_call.1} parent=1 // pred_check
      _
    $region43: #{tpu_custom_call.1} parent=1 // pred_check_branch
      %330 = sbr.rel (0) target = $region45
    $region44: #{tpu_custom_call.1} parent=1 // pred_region
      %331 = dma.done [#allocation4], 32
    $region45: #{tpu_custom_call.1} parent=1 // pred_fallthru
      _
    %332 = vsyncpa [#allocation3], 1
    %333 = vsyncpa [#allocation6], 1
    %334 = vsyncpa [#allocation4], 1

</llo_original>
